<compile_context>
chip_gen: v7x
topology: tpu7x:2x2x1
jax: 0.10.0
libtpu: 0.0.40
codegen_flags: <defaults>
</compile_context>

<pallas_src>
import numpy as np

import jax
import jax.numpy as jnp
from jax import lax
from jax.experimental import pallas as pl
from jax.experimental.pallas import tpu as pltpu


# ---------------------------------------------------------------------------
# Parameter preparation (PyTorch layouts -> kernel layouts, BN1 folded to scale/bias,
# BN2 scale folded into the conv1 weights, weights cast to bf16).
# ---------------------------------------------------------------------------
def prepare_params(torch_params, eps=1e-5):
    """torch_params = (gamma1, beta1, mean1, var1, w1_OIHW, gamma2, beta2, mean2, var2, w2_OIHW)."""
    g1, b1, m1, v1, w1, g2, b2, m2, v2, w2 = torch_params
    Cin = g1.shape[0]
    Cmid, G = g2.shape[0], w2.shape[0]

    s1 = g1 / jnp.sqrt(v1 + eps)
    bb1 = b1 - m1 * s1
    s2 = g2 / jnp.sqrt(v2 + eps)
    bb2 = b2 - m2 * s2

    # conv1 weight (Cmid, Cin, 1, 1) -> (Cmid, Cin), with the BN2 scale folded in
    # (fold in f32, then cast to bf16 for the MXU).
    w1_folded = (s2[:, None] * w1[:, :, 0, 0]).astype(jnp.bfloat16)
    # conv2 weight (G, Cmid, 3, 3) -> (G, 9*Cmid), tap-major (ky*3+kx), channel-minor
    w2t = jnp.transpose(w2, (0, 2, 3, 1)).reshape(G, 9 * Cmid).astype(jnp.bfloat16)

    return (s1.reshape(Cin, 1).astype(jnp.float32),
            bb1.reshape(Cin, 1).astype(jnp.float32),
            w1_folded,
            bb2.reshape(Cmid, 1).astype(jnp.float32),
            w2t)


def _images_per_block(N, cap=4):
    """Largest divisor of N that is <= min(cap, N//2); keeps grid length >= 2."""
    best = 1
    for cand in range(2, min(cap, max(N // 2, 1)) + 1):
        if N % cand == 0:
            best = cand
    return best


# ---------------------------------------------------------------------------
# Fused forward pass
# ---------------------------------------------------------------------------
@jax.jit
def dense_layer_forward(x_nchw, kparams):
    """x_nchw: (N, Cin, H, W) float32.  Returns (N, Cin+G, H, W) float32."""
    s1, b1, w1t, b2, w2t = kparams
    N, Cin, H, W = x_nchw.shape
    Cmid = w1t.shape[0]
    G = w2t.shape[0]
    M = H * W

    x3 = x_nchw.reshape(N, Cin, M)          # free reshape, stays NCHW-flat

    # Images per grid step (grid length N//B, kept >= 2 for the two v7x TCs).
    B = _images_per_block(N)
    n_blocks = N // B

    # 3x3 taps, (ky*3+kx)-major order matching the conv2 weight reshape.
    taps = [(dy, dx) for dy in (-1, 0, 1) for dx in (-1, 0, 1)]

    # Precomputed (9, M) boundary mask (1.0 where the shifted tap stays inside the
    # image, 0.0 otherwise).  Built with numpy at trace time -> compile-time constant.
    yy, xx = np.divmod(np.arange(M), W)
    mask_np = np.stack(
        [((yy + dy >= 0) & (yy + dy < H) & (xx + dx >= 0) & (xx + dx < W))
         .astype(np.float32) for dy, dx in taps], axis=0)
    mask_bf16 = jnp.asarray(mask_np, dtype=jnp.bfloat16)          # (9, M)

    def kernel(x_ref, s1_ref, b1_ref, w1_ref, b2_ref, w2_ref, mask_ref, o_ref):
        # Constant-per-step blocks, loaded once (hoisted out of the image loop).
        s1v = s1_ref[...]                       # (Cin, 1)  f32
        b1v = b1_ref[...]                       # (Cin, 1)  f32
        w1v = w1_ref[...]                       # (Cmid, Cin) bf16 (BN2-scale folded)
        b2v = b2_ref[...]                       # (Cmid, 1) f32
        w2v = w2_ref[...]                       # (G, 9*Cmid) bf16
        mask = mask_ref[...]                    # (9, M)    bf16

        # TODO(synk): for large B, wrap this in lax.fori_loop to bound live ranges.
        for bimg in range(B):
            x = x_ref[bimg]                                           # (Cin, M) f32
            # BN1 + ReLU1 (f32, VPU)
            h = jnp.maximum(x * s1v + b1v, 0.0)
            # conv1 (1x1) == channel matmul on the MXU; BN2 scale already in w1v.
            mid = jnp.dot(w1v, h.astype(jnp.bfloat16),
                          preferred_element_type=jnp.float32)         # (Cmid, M) f32
            # BN2 (bias only) + ReLU2
            z = jnp.maximum(mid + b2v, 0.0)
            zb = z.astype(jnp.bfloat16)

            # im2col for the 3x3 conv: spatial neighbours are lane shifts of the
            # flattened pixel axis; out-of-image taps killed by the precomputed mask.
            slabs = []
            for t, (dy, dx) in enumerate(taps):
                off = dy * W + dx
                sh = zb if off == 0 else jnp.roll(zb, -off, axis=1)   # sh[:, p] = z[:, p+off]
                slabs.append(sh * mask[t:t + 1, :])                   # bf16 mask-multiply
            zstack = jnp.concatenate(slabs, axis=0)                   # (9*Cmid, M) bf16

            # conv2 (3x3) as a single K=9*Cmid MXU matmul, f32 accumulate.
            conv = jnp.dot(w2v, zstack,
                           preferred_element_type=jnp.float32)        # (G, M) f32

            # channel concat done in-kernel: [original x ; conv2 output]
            o_ref[bimg, :Cin, :] = x
            o_ref[bimg, Cin:, :] = conv

    out3 = pl.pallas_call(
        kernel,
        out_shape=jax.ShapeDtypeStruct((N, Cin + G, M), jnp.float32),
        grid=(n_blocks,),
        in_specs=[
            pl.BlockSpec((B, Cin, M), lambda n: (n, 0, 0)),    # x (B images per step)
            pl.BlockSpec((Cin, 1), lambda n: (0, 0)),          # BN1 scale
            pl.BlockSpec((Cin, 1), lambda n: (0, 0)),          # BN1 bias
            pl.BlockSpec((Cmid, Cin), lambda n: (0, 0)),       # conv1 weight (bf16, s2-folded)
            pl.BlockSpec((Cmid, 1), lambda n: (0, 0)),         # BN2 bias
            pl.BlockSpec((G, 9 * Cmid), lambda n: (0, 0)),     # conv2 weight (bf16)
            pl.BlockSpec((9, M), lambda n: (0, 0)),            # 3x3 boundary mask (bf16)
        ],
        out_specs=pl.BlockSpec((B, Cin + G, M), lambda n: (n, 0, 0)),
        compiler_params=pltpu.CompilerParams(dimension_semantics=("parallel",)),
    )(x3, s1, b1, w1t, b2, w2t, mask_bf16)

    return out3.reshape(N, Cin + G, H, W)


# ---------------------------------------------------------------------------
# Pure-JAX reference mirroring the PyTorch module exactly (NCHW, OIHW weights).
# ---------------------------------------------------------------------------
def dense_layer_reference(x, torch_params, eps=1e-5):
    g1, b1, m1, v1, w1, g2, b2, m2, v2, w2 = torch_params

    def bn(t, g, b, m, v):
        s = (g / jnp.sqrt(v + eps))[None, :, None, None]
        return (t - m[None, :, None, None]) * s + b[None, :, None, None]

    h = jnp.maximum(bn(x, g1, b1, m1, v1), 0.0)
    y = lax.conv_general_dilated(h, w1, (1, 1), "VALID",
                                 dimension_numbers=("NCHW", "OIHW", "NCHW"))
    z = jnp.maximum(bn(y, g2, b2, m2, v2), 0.0)
    out = lax.conv_general_dilated(z, w2, (1, 1), ((1, 1), (1, 1)),
                                   dimension_numbers=("NCHW", "OIHW", "NCHW"))
    return jnp.concatenate([x, out], axis=1)


if __name__ == "__main__":
    # DenseLayer(num_input_features=8, growth_rate=8, bn_size=4, drop_rate=0.0)
    N, Cin, H, W = 2, 8, 16, 16
    growth_rate, bn_size = 8, 4
    Cmid = bn_size * growth_rate      # 32
    G = growth_rate                   # 8
    eps = 1e-5

    key = jax.random.PRNGKey(0)
    ks = jax.random.split(key, 11)
    x = jax.random.normal(ks[0], (N, Cin, H, W), jnp.float32)

    # Eval-mode BatchNorm parameters / running stats.
    gamma1 = jax.random.uniform(ks[1], (Cin,), jnp.float32, 0.5, 1.5)
    beta1 = 0.1 * jax.random.normal(ks[2], (Cin,), jnp.float32)
    mean1 = 0.1 * jax.random.normal(ks[3], (Cin,), jnp.float32)
    var1 = jax.random.uniform(ks[4], (Cin,), jnp.float32, 0.5, 1.5)
    gamma2 = jax.random.uniform(ks[5], (Cmid,), jnp.float32, 0.5, 1.5)
    beta2 = 0.1 * jax.random.normal(ks[6], (Cmid,), jnp.float32)
    mean2 = 0.1 * jax.random.normal(ks[7], (Cmid,), jnp.float32)
    var2 = jax.random.uniform(ks[8], (Cmid,), jnp.float32, 0.5, 1.5)

    # Conv weights in native PyTorch layouts (OIHW); converted by prepare_params.
    w1 = jax.random.normal(ks[9], (Cmid, Cin, 1, 1), jnp.float32) / jnp.sqrt(Cin)
    w2 = 0.05 * jax.random.normal(ks[10], (G, Cmid, 3, 3), jnp.float32)

    torch_params = (gamma1, beta1, mean1, var1, w1, gamma2, beta2, mean2, var2, w2)
    kparams = prepare_params(torch_params, eps)

    out = jax.block_until_ready(dense_layer_forward(x, kparams))
    ref = jax.block_until_ready(dense_layer_reference(x, torch_params, eps))

    assert out.shape == (N, Cin + G, H, W), out.shape
    max_err = float(jnp.max(jnp.abs(out - ref)))
    # bf16 matmul inputs (f32 accumulation, BN2 scale folded into bf16 weights)
    # vs an all-f32 reference.
    if max_err > 5e-2:
        raise AssertionError(f"mismatch vs reference: max abs err = {max_err}")
    print("KERNEL_OK")
</pallas_src>

<mosaic_0001>
module attributes {stable_mosaic.version = 11 : i64} {
  func.func @kernel(%arg0: i32, %arg1: memref<1x8x256xf32, #tpu.memory_space<vmem>>, %arg2: memref<8x1xf32, #tpu.memory_space<vmem>>, %arg3: memref<8x1xf32, #tpu.memory_space<vmem>>, %arg4: memref<32x8xbf16, #tpu.memory_space<vmem>>, %arg5: memref<32x1xf32, #tpu.memory_space<vmem>>, %arg6: memref<8x288xbf16, #tpu.memory_space<vmem>>, %arg7: memref<9x256xbf16, #tpu.memory_space<vmem>>, %arg8: memref<1x16x256xf32, #tpu.memory_space<vmem>>) attributes {dimension_semantics = [#tpu.dimension_semantics<parallel>], iteration_bounds = array<i64: 2>, scalar_prefetch = 0 : i64, scratch_operands = 0 : i64, tpu.core_type = #tpu.core_type<tc>, window_params = [{transform_indices = @transform_0, window_bounds = array<i64: 1, 8, 256>}, {pipeline_mode = #tpu.pipeline_mode<synchronous>, transform_indices = @transform_1, window_bounds = array<i64: 8, 1>}, {pipeline_mode = #tpu.pipeline_mode<synchronous>, transform_indices = @transform_2, window_bounds = array<i64: 8, 1>}, {pipeline_mode = #tpu.pipeline_mode<synchronous>, transform_indices = @transform_3, window_bounds = array<i64: 32, 8>}, {pipeline_mode = #tpu.pipeline_mode<synchronous>, transform_indices = @transform_4, window_bounds = array<i64: 32, 1>}, {pipeline_mode = #tpu.pipeline_mode<synchronous>, transform_indices = @transform_5, window_bounds = array<i64: 8, 288>}, {pipeline_mode = #tpu.pipeline_mode<synchronous>, transform_indices = @transform_6, window_bounds = array<i64: 9, 256>}, {transform_indices = @transform_7, window_bounds = array<i64: 1, 16, 256>}]} {
    %c0 = arith.constant 0 : index
    %c0_0 = arith.constant 0 : index
    %0 = vector.load %arg2[%c0, %c0_0] : memref<8x1xf32, #tpu.memory_space<vmem>>, vector<8x1xf32>
    %c0_1 = arith.constant 0 : index
    %c0_2 = arith.constant 0 : index
    %1 = vector.load %arg3[%c0_1, %c0_2] : memref<8x1xf32, #tpu.memory_space<vmem>>, vector<8x1xf32>
    %c0_3 = arith.constant 0 : index
    %c0_4 = arith.constant 0 : index
    %2 = vector.load %arg4[%c0_3, %c0_4] : memref<32x8xbf16, #tpu.memory_space<vmem>>, vector<32x8xbf16>
    %c0_5 = arith.constant 0 : index
    %c0_6 = arith.constant 0 : index
    %3 = vector.load %arg5[%c0_5, %c0_6] : memref<32x1xf32, #tpu.memory_space<vmem>>, vector<32x1xf32>
    %c0_7 = arith.constant 0 : index
    %c0_8 = arith.constant 0 : index
    %4 = vector.load %arg6[%c0_7, %c0_8] : memref<8x288xbf16, #tpu.memory_space<vmem>>, vector<8x288xbf16>
    %c0_9 = arith.constant 0 : index
    %c0_10 = arith.constant 0 : index
    %5 = vector.load %arg7[%c0_9, %c0_10] : memref<9x256xbf16, #tpu.memory_space<vmem>>, vector<9x256xbf16>
    %c0_11 = arith.constant 0 : index
    %c0_12 = arith.constant 0 : index
    %c0_13 = arith.constant 0 : index
    %6 = vector.load %arg1[%c0_11, %c0_12, %c0_13] : memref<1x8x256xf32, #tpu.memory_space<vmem>>, vector<1x8x256xf32>
    %7 = vector.shape_cast %6 : vector<1x8x256xf32> to vector<8x256xf32>
    %8 = vector.broadcast %0 : vector<8x1xf32> to vector<8x256xf32>
    %9 = arith.mulf %7, %8 : vector<8x256xf32>
    %10 = vector.broadcast %1 : vector<8x1xf32> to vector<8x256xf32>
    %11 = arith.addf %9, %10 : vector<8x256xf32>
    %cst = arith.constant 0.000000e+00 : f32
    %12 = vector.broadcast %cst : f32 to vector<8x256xf32>
    %13 = arith.maximumf %11, %12 : vector<8x256xf32>
    %14 = arith.truncf %13 : vector<8x256xf32> to vector<8x256xbf16>
    %cst_14 = arith.constant dense<0.000000e+00> : vector<32x256xf32>
    %15 = tpu.matmul %2, %14, %cst_14 {dimension_numbers = #tpu.dot_dimension_numbers<[1], [0], [0], [1], [0, 0, 1, 1], [], []>} : vector<32x8xbf16>, vector<8x256xbf16>, vector<32x256xf32> -> vector<32x256xf32>
    %16 = vector.broadcast %3 : vector<32x1xf32> to vector<32x256xf32>
    %17 = arith.addf %15, %16 : vector<32x256xf32>
    %cst_15 = arith.constant 0.000000e+00 : f32
    %18 = vector.broadcast %cst_15 : f32 to vector<32x256xf32>
    %19 = arith.maximumf %17, %18 : vector<32x256xf32>
    %20 = arith.truncf %19 : vector<32x256xf32> to vector<32x256xbf16>
    %21 = vector.extract_strided_slice %20 {offsets = [0, 239], sizes = [32, 17], strides = [1, 1]} : vector<32x256xbf16> to vector<32x17xbf16>
    %22 = vector.extract_strided_slice %20 {offsets = [0, 0], sizes = [32, 239], strides = [1, 1]} : vector<32x256xbf16> to vector<32x239xbf16>
    %23 = tpu.concatenate %21, %22 in 1 : vector<32x17xbf16>, vector<32x239xbf16> -> vector<32x256xbf16>
    %24 = vector.extract_strided_slice %5 {offsets = [0, 0], sizes = [1, 256], strides = [1, 1]} : vector<9x256xbf16> to vector<1x256xbf16>
    %25 = vector.broadcast %24 : vector<1x256xbf16> to vector<32x256xbf16>
    %26 = arith.mulf %23, %25 : vector<32x256xbf16>
    %27 = vector.extract_strided_slice %20 {offsets = [0, 240], sizes = [32, 16], strides = [1, 1]} : vector<32x256xbf16> to vector<32x16xbf16>
    %28 = vector.extract_strided_slice %20 {offsets = [0, 0], sizes = [32, 240], strides = [1, 1]} : vector<32x256xbf16> to vector<32x240xbf16>
    %29 = tpu.concatenate %27, %28 in 1 : vector<32x16xbf16>, vector<32x240xbf16> -> vector<32x256xbf16>
    %30 = vector.extract_strided_slice %5 {offsets = [1, 0], sizes = [1, 256], strides = [1, 1]} : vector<9x256xbf16> to vector<1x256xbf16>
    %31 = vector.broadcast %30 : vector<1x256xbf16> to vector<32x256xbf16>
    %32 = arith.mulf %29, %31 : vector<32x256xbf16>
    %33 = vector.extract_strided_slice %20 {offsets = [0, 241], sizes = [32, 15], strides = [1, 1]} : vector<32x256xbf16> to vector<32x15xbf16>
    %34 = vector.extract_strided_slice %20 {offsets = [0, 0], sizes = [32, 241], strides = [1, 1]} : vector<32x256xbf16> to vector<32x241xbf16>
    %35 = tpu.concatenate %33, %34 in 1 : vector<32x15xbf16>, vector<32x241xbf16> -> vector<32x256xbf16>
    %36 = vector.extract_strided_slice %5 {offsets = [2, 0], sizes = [1, 256], strides = [1, 1]} : vector<9x256xbf16> to vector<1x256xbf16>
    %37 = vector.broadcast %36 : vector<1x256xbf16> to vector<32x256xbf16>
    %38 = arith.mulf %35, %37 : vector<32x256xbf16>
    %39 = vector.extract_strided_slice %20 {offsets = [0, 255], sizes = [32, 1], strides = [1, 1]} : vector<32x256xbf16> to vector<32x1xbf16>
    %40 = vector.extract_strided_slice %20 {offsets = [0, 0], sizes = [32, 255], strides = [1, 1]} : vector<32x256xbf16> to vector<32x255xbf16>
    %41 = tpu.concatenate %39, %40 in 1 : vector<32x1xbf16>, vector<32x255xbf16> -> vector<32x256xbf16>
    %42 = vector.extract_strided_slice %5 {offsets = [3, 0], sizes = [1, 256], strides = [1, 1]} : vector<9x256xbf16> to vector<1x256xbf16>
    %43 = vector.broadcast %42 : vector<1x256xbf16> to vector<32x256xbf16>
    %44 = arith.mulf %41, %43 : vector<32x256xbf16>
    %45 = vector.extract_strided_slice %5 {offsets = [4, 0], sizes = [1, 256], strides = [1, 1]} : vector<9x256xbf16> to vector<1x256xbf16>
    %46 = vector.broadcast %45 : vector<1x256xbf16> to vector<32x256xbf16>
    %47 = arith.mulf %20, %46 : vector<32x256xbf16>
    %48 = vector.extract_strided_slice %20 {offsets = [0, 1], sizes = [32, 255], strides = [1, 1]} : vector<32x256xbf16> to vector<32x255xbf16>
    %49 = vector.extract_strided_slice %20 {offsets = [0, 0], sizes = [32, 1], strides = [1, 1]} : vector<32x256xbf16> to vector<32x1xbf16>
    %50 = tpu.concatenate %48, %49 in 1 : vector<32x255xbf16>, vector<32x1xbf16> -> vector<32x256xbf16>
    %51 = vector.extract_strided_slice %5 {offsets = [5, 0], sizes = [1, 256], strides = [1, 1]} : vector<9x256xbf16> to vector<1x256xbf16>
    %52 = vector.broadcast %51 : vector<1x256xbf16> to vector<32x256xbf16>
    %53 = arith.mulf %50, %52 : vector<32x256xbf16>
    %54 = vector.extract_strided_slice %20 {offsets = [0, 15], sizes = [32, 241], strides = [1, 1]} : vector<32x256xbf16> to vector<32x241xbf16>
    %55 = vector.extract_strided_slice %20 {offsets = [0, 0], sizes = [32, 15], strides = [1, 1]} : vector<32x256xbf16> to vector<32x15xbf16>
    %56 = tpu.concatenate %54, %55 in 1 : vector<32x241xbf16>, vector<32x15xbf16> -> vector<32x256xbf16>
    %57 = vector.extract_strided_slice %5 {offsets = [6, 0], sizes = [1, 256], strides = [1, 1]} : vector<9x256xbf16> to vector<1x256xbf16>
    %58 = vector.broadcast %57 : vector<1x256xbf16> to vector<32x256xbf16>
    %59 = arith.mulf %56, %58 : vector<32x256xbf16>
    %60 = vector.extract_strided_slice %20 {offsets = [0, 16], sizes = [32, 240], strides = [1, 1]} : vector<32x256xbf16> to vector<32x240xbf16>
    %61 = vector.extract_strided_slice %20 {offsets = [0, 0], sizes = [32, 16], strides = [1, 1]} : vector<32x256xbf16> to vector<32x16xbf16>
    %62 = tpu.concatenate %60, %61 in 1 : vector<32x240xbf16>, vector<32x16xbf16> -> vector<32x256xbf16>
    %63 = vector.extract_strided_slice %5 {offsets = [7, 0], sizes = [1, 256], strides = [1, 1]} : vector<9x256xbf16> to vector<1x256xbf16>
    %64 = vector.broadcast %63 : vector<1x256xbf16> to vector<32x256xbf16>
    %65 = arith.mulf %62, %64 : vector<32x256xbf16>
    %66 = vector.extract_strided_slice %20 {offsets = [0, 17], sizes = [32, 239], strides = [1, 1]} : vector<32x256xbf16> to vector<32x239xbf16>
    %67 = vector.extract_strided_slice %20 {offsets = [0, 0], sizes = [32, 17], strides = [1, 1]} : vector<32x256xbf16> to vector<32x17xbf16>
    %68 = tpu.concatenate %66, %67 in 1 : vector<32x239xbf16>, vector<32x17xbf16> -> vector<32x256xbf16>
    %69 = vector.extract_strided_slice %5 {offsets = [8, 0], sizes = [1, 256], strides = [1, 1]} : vector<9x256xbf16> to vector<1x256xbf16>
    %70 = vector.broadcast %69 : vector<1x256xbf16> to vector<32x256xbf16>
    %71 = arith.mulf %68, %70 : vector<32x256xbf16>
    %72 = tpu.concatenate %26, %32, %38, %44, %47, %53, %59, %65, %71 in 0 : vector<32x256xbf16>, vector<32x256xbf16>, vector<32x256xbf16>, vector<32x256xbf16>, vector<32x256xbf16>, vector<32x256xbf16>, vector<32x256xbf16>, vector<32x256xbf16>, vector<32x256xbf16> -> vector<288x256xbf16>
    %cst_16 = arith.constant dense<0.000000e+00> : vector<8x256xf32>
    %73 = tpu.matmul %4, %72, %cst_16 {dimension_numbers = #tpu.dot_dimension_numbers<[1], [0], [0], [1], [0, 0, 1, 1], [], []>} : vector<8x288xbf16>, vector<288x256xbf16>, vector<8x256xf32> -> vector<8x256xf32>
    %c0_17 = arith.constant 0 : index
    %c0_18 = arith.constant 0 : index
    %c0_19 = arith.constant 0 : index
    %74 = vector.load %arg8[%c0_17, %c0_18, %c0_19] : memref<1x16x256xf32, #tpu.memory_space<vmem>>, vector<1x8x256xf32>
    %75 = vector.shape_cast %74 : vector<1x8x256xf32> to vector<8x256xf32>
    %76 = vector.shape_cast %7 : vector<8x256xf32> to vector<1x8x256xf32>
    tpu.vector_store %arg8[%c0_17, %c0_18, %c0_19], %76 {strides = array<i32>} : memref<1x16x256xf32, #tpu.memory_space<vmem>>, vector<1x8x256xf32>,
    %c0_20 = arith.constant 0 : index
    %c8 = arith.constant 8 : index
    %c0_21 = arith.constant 0 : index
    %77 = vector.load %arg8[%c0_20, %c8, %c0_21] : memref<1x16x256xf32, #tpu.memory_space<vmem>>, vector<1x8x256xf32>
    %78 = vector.shape_cast %77 : vector<1x8x256xf32> to vector<8x256xf32>
    %79 = vector.shape_cast %73 : vector<8x256xf32> to vector<1x8x256xf32>
    tpu.vector_store %arg8[%c0_20, %c8, %c0_21], %79 {strides = array<i32>} : memref<1x16x256xf32, #tpu.memory_space<vmem>>, vector<1x8x256xf32>,
    return
  }
  func.func @transform_0(%arg0: i32) -> (i32, i32, i32) {
    %c0_i32 = arith.constant 0 : i32
    %c0_i32_0 = arith.constant 0 : i32
    %c0_i32_1 = arith.constant 0 : i32
    return %arg0, %c0_i32, %c0_i32_0 : i32, i32, i32
  }
  func.func @transform_1(%arg0: i32) -> (i32, i32) {
    %c0_i32 = arith.constant 0 : i32
    %c0_i32_0 = arith.constant 0 : i32
    %c0_i32_1 = arith.constant 0 : i32
    return %c0_i32, %c0_i32_0 : i32, i32
  }
  func.func @transform_2(%arg0: i32) -> (i32, i32) {
    %c0_i32 = arith.constant 0 : i32
    %c0_i32_0 = arith.constant 0 : i32
    %c0_i32_1 = arith.constant 0 : i32
    return %c0_i32, %c0_i32_0 : i32, i32
  }
  func.func @transform_3(%arg0: i32) -> (i32, i32) {
    %c0_i32 = arith.constant 0 : i32
    %c0_i32_0 = arith.constant 0 : i32
    %c0_i32_1 = arith.constant 0 : i32
    return %c0_i32, %c0_i32_0 : i32, i32
  }
  func.func @transform_4(%arg0: i32) -> (i32, i32) {
    %c0_i32 = arith.constant 0 : i32
    %c0_i32_0 = arith.constant 0 : i32
    %c0_i32_1 = arith.constant 0 : i32
    return %c0_i32, %c0_i32_0 : i32, i32
  }
  func.func @transform_5(%arg0: i32) -> (i32, i32) {
    %c0_i32 = arith.constant 0 : i32
    %c0_i32_0 = arith.constant 0 : i32
    %c0_i32_1 = arith.constant 0 : i32
    return %c0_i32, %c0_i32_0 : i32, i32
  }
  func.func @transform_6(%arg0: i32) -> (i32, i32) {
    %c0_i32 = arith.constant 0 : i32
    %c0_i32_0 = arith.constant 0 : i32
    %c0_i32_1 = arith.constant 0 : i32
    return %c0_i32, %c0_i32_0 : i32, i32
  }
  func.func @transform_7(%arg0: i32) -> (i32, i32, i32) {
    %c0_i32 = arith.constant 0 : i32
    %c0_i32_0 = arith.constant 0 : i32
    %c0_i32_1 = arith.constant 0 : i32
    return %arg0, %c0_i32, %c0_i32_0 : i32, i32, i32
  }
}

</mosaic_0001>

<llo_original>
// kernel: dense_layer_forward.1
$region0: #{dense_layer_forward.1}
  #allocation0 [shape = 'u32[]', space=smem, size = 0x4, offset = 0x4, fixed_abs, tag = 'smem constant byte address 0x4 - core index']
  #allocation1 [shape = 'u32[144,128]{1,0:T(1,128)}', space=vmem, size = 0x12000, scoped, tag = 'internal scratch']
  %s0 = inlined_call_operand.vmem [shape: f32[2,8,256], index: 0, kind: input, shape index: {}]
  %s1 = inlined_call_operand.vmem [shape: f32[8,1], index: 1, kind: input, shape index: {}]
  %s2 = inlined_call_operand.vmem [shape: f32[8,1], index: 2, kind: input, shape index: {}]
  %s3 = inlined_call_operand.vmem [shape: bf16[32,8], index: 3, kind: input, shape index: {}]
  %s4 = inlined_call_operand.vmem [shape: f32[32,1], index: 4, kind: input, shape index: {}]
  %s5 = inlined_call_operand.vmem [shape: bf16[8,288], index: 5, kind: input, shape index: {}]
  %s6 = inlined_call_operand.vmem [shape: bf16[9,256], index: 6, kind: input, shape index: {}]
  %s7 = inlined_call_operand.vmem [shape: f32[2,16,256], index: 7, kind: output, shape index: {}]
  %s8 = sld [smem:[#allocation0]]
  $region61: #{dense_layer_forward.1} parent=0
    _
  %s10 = ssub.s32 1, %s8
  %s11 = scalar_select 0, %s10, %s8
  loop: start=0, step=1, limit=4
  $region2: #{dense_layer_forward.1} parent=0 // loop_pre_header
    _
  $region3: #{dense_layer_forward.1} parent=0 // loop_header
    %s13 = sphi 0, %s17
    %p14 = scmp.ge.s32.totalorder %s13, 4
    %s23 = sphi 0, %s25
    %s26 = sphi 0, %s23
    %s27 = sphi 0, %s26
    %s43 = sphi 0, %s27
    %s47 = sphi 0, %s47
    %s49 = sphi 0, %s47
    %s50 = sphi 0, %s49
    %s64 = sphi 0, %s50
    %s68 = sphi 0, %s68
    %s70 = sphi 0, %s68
    %s71 = sphi 0, %s70
    %s85 = sphi 0, %s71
    %s89 = sphi 0, %s89
    %s91 = sphi 0, %s89
    %s92 = sphi 0, %s91
    %s106 = sphi 0, %s92
    %s110 = sphi 0, %s110
    %s112 = sphi 0, %s110
    %s113 = sphi 0, %s112
    %s127 = sphi 0, %s113
    %s131 = sphi 0, %s131
    %s133 = sphi 0, %s131
    %s134 = sphi 0, %s133
    %s148 = sphi 0, %s134
    %s152 = sphi 0, %s152
    %s154 = sphi 0, %s152
    %s155 = sphi 0, %s154
    %s169 = sphi 0, %s155
    %s175 = sphi 0, %s177
    %s178 = sphi 0, %s175
    %s179 = sphi 0, %s178
    %s195 = sphi 0, %s179
  $region4: #{dense_layer_forward.1} parent=0 // loop_header_branch
    %16 = sbr.rel (%p14) target = $region8
  $region5: #{dense_layer_forward.1} parent=0 // loop_body
    %s18 = ssub.s32 %s13, 1
    %s19 = ssub.s32 %s13, 2
    %s20 = sadd.s32 %s13, 1
    %s21 = ssub.s32 %s13, %s20
    %p22 = scmp.eq.s32.totalorder %s21, 0
    %s24 = sadd.s32 %s23, 1
    %s25 = scalar_select %p22, %s23, %s24
    %p28 = pneg %p22
    %p29 = scmp.eq.s32.totalorder %s13, 1
    %p30 = por %p28, %p29
    %p31 = scmp.ne.s32.totalorder %s23, %s26
    %p32 = scmp.eq.s32.totalorder %s13, 0
    %p33 = por %p31, %p32
    %p34 = scmp.ne.s32.totalorder %s23, %s26
    %p35 = scmp.eq.s32.totalorder %s18, 1
    %p36 = por %p34, %p35
    %p37 = scmp.ne.s32.totalorder %s26, %s27
    %p38 = scmp.eq.s32.totalorder %s18, 0
    %p39 = por %p37, %p38
    %p40 = scmp.ne.s32.totalorder %s26, %s27
    %p41 = scmp.eq.s32.totalorder %s19, 1
    %p42 = por %p40, %p41
    %p44 = scmp.ne.s32.totalorder %s27, %s43
    %p45 = scmp.eq.s32.totalorder %s19, 0
    %p46 = por %p44, %p45
    %s48 = sadd.s32 %s47, 1
    %p51 = scmp.eq.s32.totalorder %s13, 1
    %p52 = scmp.ne.s32.totalorder %s47, %s49
    %p53 = scmp.eq.s32.totalorder %s13, 0
    %p54 = por %p52, %p53
    %p55 = scmp.ne.s32.totalorder %s47, %s49
    %p56 = scmp.eq.s32.totalorder %s18, 1
    %p57 = por %p55, %p56
    %p58 = scmp.ne.s32.totalorder %s49, %s50
    %p59 = scmp.eq.s32.totalorder %s18, 0
    %p60 = por %p58, %p59
    %p61 = scmp.ne.s32.totalorder %s49, %s50
    %p62 = scmp.eq.s32.totalorder %s19, 1
    %p63 = por %p61, %p62
    %p65 = scmp.ne.s32.totalorder %s50, %s64
    %p66 = scmp.eq.s32.totalorder %s19, 0
    %p67 = por %p65, %p66
    %s69 = sadd.s32 %s68, 1
    %p72 = scmp.eq.s32.totalorder %s13, 1
    %p73 = scmp.ne.s32.totalorder %s68, %s70
    %p74 = scmp.eq.s32.totalorder %s13, 0
    %p75 = por %p73, %p74
    %p76 = scmp.ne.s32.totalorder %s68, %s70
    %p77 = scmp.eq.s32.totalorder %s18, 1
    %p78 = por %p76, %p77
    %p79 = scmp.ne.s32.totalorder %s70, %s71
    %p80 = scmp.eq.s32.totalorder %s18, 0
    %p81 = por %p79, %p80
    %p82 = scmp.ne.s32.totalorder %s70, %s71
    %p83 = scmp.eq.s32.totalorder %s19, 1
    %p84 = por %p82, %p83
    %p86 = scmp.ne.s32.totalorder %s71, %s85
    %p87 = scmp.eq.s32.totalorder %s19, 0
    %p88 = por %p86, %p87
    %s90 = sadd.s32 %s89, 1
    %p93 = scmp.eq.s32.totalorder %s13, 1
    %p94 = scmp.ne.s32.totalorder %s89, %s91
    %p95 = scmp.eq.s32.totalorder %s13, 0
    %p96 = por %p94, %p95
    %p97 = scmp.ne.s32.totalorder %s89, %s91
    %p98 = scmp.eq.s32.totalorder %s18, 1
    %p99 = por %p97, %p98
    %p100 = scmp.ne.s32.totalorder %s91, %s92
    %p101 = scmp.eq.s32.totalorder %s18, 0
    %p102 = por %p100, %p101
    %p103 = scmp.ne.s32.totalorder %s91, %s92
    %p104 = scmp.eq.s32.totalorder %s19, 1
    %p105 = por %p103, %p104
    %p107 = scmp.ne.s32.totalorder %s92, %s106
    %p108 = scmp.eq.s32.totalorder %s19, 0
    %p109 = por %p107, %p108
    %s111 = sadd.s32 %s110, 1
    %p114 = scmp.eq.s32.totalorder %s13, 1
    %p115 = scmp.ne.s32.totalorder %s110, %s112
    %p116 = scmp.eq.s32.totalorder %s13, 0
    %p117 = por %p115, %p116
    %p118 = scmp.ne.s32.totalorder %s110, %s112
    %p119 = scmp.eq.s32.totalorder %s18, 1
    %p120 = por %p118, %p119
    %p121 = scmp.ne.s32.totalorder %s112, %s113
    %p122 = scmp.eq.s32.totalorder %s18, 0
    %p123 = por %p121, %p122
    %p124 = scmp.ne.s32.totalorder %s112, %s113
    %p125 = scmp.eq.s32.totalorder %s19, 1
    %p126 = por %p124, %p125
    %p128 = scmp.ne.s32.totalorder %s113, %s127
    %p129 = scmp.eq.s32.totalorder %s19, 0
    %p130 = por %p128, %p129
    %s132 = sadd.s32 %s131, 1
    %p135 = scmp.eq.s32.totalorder %s13, 1
    %p136 = scmp.ne.s32.totalorder %s131, %s133
    %p137 = scmp.eq.s32.totalorder %s13, 0
    %p138 = por %p136, %p137
    %p139 = scmp.ne.s32.totalorder %s131, %s133
    %p140 = scmp.eq.s32.totalorder %s18, 1
    %p141 = por %p139, %p140
    %p142 = scmp.ne.s32.totalorder %s133, %s134
    %p143 = scmp.eq.s32.totalorder %s18, 0
    %p144 = por %p142, %p143
    %p145 = scmp.ne.s32.totalorder %s133, %s134
    %p146 = scmp.eq.s32.totalorder %s19, 1
    %p147 = por %p145, %p146
    %p149 = scmp.ne.s32.totalorder %s134, %s148
    %p150 = scmp.eq.s32.totalorder %s19, 0
    %p151 = por %p149, %p150
    %s153 = sadd.s32 %s152, 1
    %p156 = scmp.eq.s32.totalorder %s13, 1
    %p157 = scmp.ne.s32.totalorder %s152, %s154
    %p158 = scmp.eq.s32.totalorder %s13, 0
    %p159 = por %p157, %p158
    %p160 = scmp.ne.s32.totalorder %s152, %s154
    %p161 = scmp.eq.s32.totalorder %s18, 1
    %p162 = por %p160, %p161
    %p163 = scmp.ne.s32.totalorder %s154, %s155
    %p164 = scmp.eq.s32.totalorder %s18, 0
    %p165 = por %p163, %p164
    %p166 = scmp.ne.s32.totalorder %s154, %s155
    %p167 = scmp.eq.s32.totalorder %s19, 1
    %p168 = por %p166, %p167
    %p170 = scmp.ne.s32.totalorder %s155, %s169
    %p171 = scmp.eq.s32.totalorder %s19, 0
    %p172 = por %p170, %p171
    %s173 = ssub.s32 %s13, %s20
    %p174 = scmp.eq.s32.totalorder %s173, 0
    %s176 = sadd.s32 %s175, 1
    %s177 = scalar_select %p174, %s175, %s176
    %p180 = pneg %p174
    %p181 = scmp.eq.s32.totalorder %s13, 1
    %p182 = por %p180, %p181
    %p183 = scmp.ne.s32.totalorder %s175, %s178
    %p184 = scmp.eq.s32.totalorder %s13, 0
    %p185 = por %p183, %p184
    %p186 = scmp.ne.s32.totalorder %s175, %s178
    %p187 = scmp.eq.s32.totalorder %s18, 1
    %p188 = por %p186, %p187
    %p189 = scmp.ne.s32.totalorder %s178, %s179
    %p190 = scmp.eq.s32.totalorder %s18, 0
    %p191 = por %p189, %p190
    %p192 = scmp.ne.s32.totalorder %s178, %s179
    %p193 = scmp.eq.s32.totalorder %s19, 1
    %p194 = por %p192, %p193
    %p196 = scmp.ne.s32.totalorder %s179, %s195
    %p197 = scmp.eq.s32.totalorder %s19, 0
    %p198 = por %p196, %p197
    %p199 = scmp.le.s32.totalorder 1, %s13
    %p200 = scmp.lt.s32.totalorder %s13, 3
    %p201 = pnand %p199, %p200
    %p202 = pneg %p201
    // Predicated region
    $region9: #{dense_layer_forward.1} parent=5 // pred_check
      _
    $region10: #{dense_layer_forward.1} parent=5 // pred_check_branch
      %204 = sbr.rel (%p201) target = $region12
    $region11: #{dense_layer_forward.1} parent=5 // pred_region
      %s205 = ssub.s32 %s13, 1
      // Predicated region
      $region13: #{dense_layer_forward.1} parent=11 // pred_check
        %p206 = pneg %p60
      $region14: #{dense_layer_forward.1} parent=11 // pred_check_branch
        %208 = sbr.rel (%p206) target = $region16
      $region15: #{dense_layer_forward.1} parent=11 // pred_region
        _
      $region16: #{dense_layer_forward.1} parent=11 // pred_fallthru
        _
      // Predicated region
      $region17: #{dense_layer_forward.1} parent=11 // pred_check
        %p209 = pneg %p81
      $region18: #{dense_layer_forward.1} parent=11 // pred_check_branch
        %211 = sbr.rel (%p209) target = $region20
      $region19: #{dense_layer_forward.1} parent=11 // pred_region
        _
      $region20: #{dense_layer_forward.1} parent=11 // pred_fallthru
        _
      // Predicated region
      $region21: #{dense_layer_forward.1} parent=11 // pred_check
        %p212 = pneg %p102
      $region22: #{dense_layer_forward.1} parent=11 // pred_check_branch
        %214 = sbr.rel (%p212) target = $region24
      $region23: #{dense_layer_forward.1} parent=11 // pred_region
        _
      $region24: #{dense_layer_forward.1} parent=11 // pred_fallthru
        _
      // Predicated region
      $region25: #{dense_layer_forward.1} parent=11 // pred_check
        %p215 = pneg %p123
      $region26: #{dense_layer_forward.1} parent=11 // pred_check_branch
        %217 = sbr.rel (%p215) target = $region28
      $region27: #{dense_layer_forward.1} parent=11 // pred_region
        _
      $region28: #{dense_layer_forward.1} parent=11 // pred_fallthru
        _
      // Predicated region
      $region29: #{dense_layer_forward.1} parent=11 // pred_check
        %p218 = pneg %p144
      $region30: #{dense_layer_forward.1} parent=11 // pred_check_branch
        %220 = sbr.rel (%p218) target = $region32
      $region31: #{dense_layer_forward.1} parent=11 // pred_region
        _
      $region32: #{dense_layer_forward.1} parent=11 // pred_fallthru
        _
      // Predicated region
      $region33: #{dense_layer_forward.1} parent=11 // pred_check
        %p221 = pneg %p165
      $region34: #{dense_layer_forward.1} parent=11 // pred_check_branch
        %223 = sbr.rel (%p221) target = $region36
      $region35: #{dense_layer_forward.1} parent=11 // pred_region
        _
      $region36: #{dense_layer_forward.1} parent=11 // pred_fallthru
        _
    $region12: #{dense_layer_forward.1} parent=5 // pred_fallthru
      _
    %p224 = scmp.lt.s32.totalorder %s13, 2
    // Predicated region
    $region37: #{dense_layer_forward.1} parent=5 // pred_check
      %p225 = pneg %p224
    $region38: #{dense_layer_forward.1} parent=5 // pred_check_branch
      %227 = sbr.rel (%p225) target = $region40
    $region39: #{dense_layer_forward.1} parent=5 // pred_region
      // Predicated region
      $region41: #{dense_layer_forward.1} parent=39 // pred_check
        %p228 = pneg %p33
      $region42: #{dense_layer_forward.1} parent=39 // pred_check_branch
        %230 = sbr.rel (%p228) target = $region44
      $region43: #{dense_layer_forward.1} parent=39 // pred_region
        %p231 = scmp.lt.s32.totalorder %s13, 1
        %s232 = scalar_select %p231, %s13, 1
        %s233 = smul.addr %s232, 2
        %s234 = smul.addr %s233, 8
        %s235 = scalar_lea.vmem %s0, %s234
      $region44: #{dense_layer_forward.1} parent=39 // pred_fallthru
        _
    $region40: #{dense_layer_forward.1} parent=5 // pred_fallthru
      _
    %p236 = scmp.le.s32.totalorder 1, %s13
    %p237 = scmp.lt.s32.totalorder %s13, 3
    %p238 = pnand %p236, %p237
    %p239 = pneg %p238
    // Predicated region
    $region45: #{dense_layer_forward.1} parent=5 // pred_check
      _
    $region46: #{dense_layer_forward.1} parent=5 // pred_check_branch
      %241 = sbr.rel (%p238) target = $region48
    $region47: #{dense_layer_forward.1} parent=5 // pred_region
      %s242 = ssub.s32 %s13, 1
      %p243 = scmp.lt.s32.totalorder %s18, 1
      %s244 = scalar_select %p243, %s18, 1
      %s245 = smul.addr %s244, 2
      %s246 = smul.addr %s245, 8
      %s247 = scalar_lea.vmem %s0, %s246
      %p248 = pneg %p39
      %p249 = pneg %p36
      %p250 = pneg %p60
      %p251 = pneg %p57
      %p252 = pneg %p81
      %p253 = pneg %p78
      %p254 = pneg %p102
      %p255 = pneg %p99
      %p256 = pneg %p123
      %p257 = pneg %p120
      %p258 = pneg %p144
      %p259 = pneg %p141
      %p260 = pneg %p165
      %p261 = pneg %p162
      %p262 = pneg %p191
      %p263 = pneg %p188
      %p264 = scmp.lt.s32.totalorder %s18, 1
      %s265 = scalar_select %p264, %s18, 1
      %s266 = smul.addr %s265, 4
      %s267 = smul.addr %s266, 8
      %s268 = scalar_lea.vmem %s7, %s267
      %p269 = scmp.lt.s32.totalorder %s18, 1
      %s270 = scalar_select %p269, %s18, 1
      %s271 = smul.addr %s270, 2
      %s272 = smul.addr %s271, 8
      %s273 = scalar_lea.vmem %s0, %s272
      %p274 = scmp.lt.s32.totalorder %s18, 1
      %s275 = scalar_select %p274, %s18, 1
      %s276 = smul.addr %s275, 4
      %s277 = smul.addr %s276, 8
      %s278 = scalar_lea.vmem %s7, %s277
      %v280 = vld [vmem:[%s1] sm:$0xff]
      %v281 = vld [vmem:[%s2] sm:$0xff]
      %v282 = vld [vmem:[%s3] sm:$0xf]
      %v283 = vld [vmem:[%s3 + $0x4] sm:$0xf]
      %v284 = vld [vmem:[%s3 + $0x8] sm:$0xf]
      %v285 = vld [vmem:[%s3 + $0xc] sm:$0xf]
      %v286 = vld [vmem:[%s4] sm:$0xff]
      %v287 = vld [vmem:[%s4 + $0x8] sm:$0xff]
      %v288 = vld [vmem:[%s4 + $0x10] sm:$0xff]
      %v289 = vld [vmem:[%s4 + $0x18] sm:$0xff]
      %v290 = vld [vmem:[%s5] sm:$0xff]
      %v291 = vld [vmem:[%s5 + $0x8] sm:$0xf]
      %v292 = vld [vmem:[%s6] sm:$0xff]
      %v293 = vld [vmem:[%s6 + $0x8] sm:$0x11]
      %v294 = vld [vmem:[%s273] sm:$0xff]
      %v295 = vld [vmem:[%s273 + $0x8] sm:$0xff]
      %297 = vset.pattern.permute.xlu0 0
      %298 = vperm.xlu0 %297, %v280
      %v299 = vpop.permute.xlu0 %298
      %v301 = vmul.f32 %v294, %v299
      %v302 = vmul.f32 %v295, %v299
      %304 = vset.pattern.permute.xlu0 0
      %305 = vperm.xlu0 %304, %v281
      %v306 = vpop.permute.xlu0 %305
      %v308 = vadd.f32 %v301, %v306
      %v309 = vadd.f32 %v302, %v306
      %v310 = vmax.f32 %v308, 0.0
      %v311 = vmax.f32 %v309, 0.0
      %v312 = vpack.c.bf16 %v310, %v310
      %v313 = vpack.c.bf16 %v311, %v311
      %315 = vset.pattern.permute.xlu0 0
      %316 = vperm.xlu0 %315, %v286
      %v317 = vpop.permute.xlu0 %316
      %320 = vset.pattern.permute.xlu0 0
      %321 = vperm.xlu0 %320, %v287
      %v322 = vpop.permute.xlu0 %321
      %325 = vset.pattern.permute.xlu0 0
      %326 = vperm.xlu0 %325, %v288
      %v327 = vpop.permute.xlu0 %326
      %330 = vset.pattern.permute.xlu0 0
      %331 = vperm.xlu0 %330, %v289
      %v332 = vpop.permute.xlu0 %331
      %v338 = vunpack.c.l.b16 %v282
      %v339 = vunpack.c.l.b16 %v283
      %v340 = vunpack.c.l.b16 %v284
      %v341 = vunpack.c.l.b16 %v285
      %v342 = vpack.c.b16 %v339, %v338
      %v343 = vpack.c.b16 %v341, %v340
      %vm344 = vcmask 64512
      %v346 = vsel %vm344, %v342, 0
      %v349 = vsel %vm344, %v343, 0
      %vm351 = vcmask 1043456
      %v353 = vsel %vm351, %v312, 0
      %v356 = vsel %vm351, %v313, 0
      %358 = vmatprep.subr.bf16.mxu0 %v356
      %359 = vmatpush1.bf16.msra.mxu0 %v353
      %360 = vmatprep.subr.bf16.mxu0 0
      %361 = vmatpush1.bf16.msra.mxu0 0
      %362 = vmatprep.subr.bf16.mxu0 0
      %363 = vmatpush1.bf16.msra.mxu0 0
      %364 = vmatprep.subr.bf16.mxu0 0
      %365 = vmatpush1.bf16.msra.mxu0 0
      %366 = vmatprep.subr.bf16.mxu0 0
      %367 = vmatpush1.bf16.msra.mxu0 0
      %368 = vmatprep.subr.bf16.mxu0 0
      %369 = vmatpush1.bf16.msra.mxu0 0
      %370 = vmatprep.subr.bf16.mxu0 0
      %371 = vmatpush1.bf16.msra.mxu0 0
      %372 = vmatprep.subr.bf16.mxu0 0
      %373 = vmatpush1.bf16.msra.mxu0 0
      %374 = vmatprep.subr.bf16.mxu0 0
      %375 = vmatpush1.bf16.msra.mxu0 0
      %376 = vmatprep.subr.bf16.mxu0 0
      %377 = vmatpush1.bf16.msra.mxu0 0
      %378 = vmatprep.subr.bf16.mxu0 0
      %379 = vmatpush1.bf16.msra.mxu0 0
      %380 = vmatprep.subr.bf16.mxu0 0
      %381 = vmatpush1.bf16.msra.mxu0 0
      %382 = vmatprep.subr.bf16.mxu0 0
      %383 = vmatpush1.bf16.msra.mxu0 0
      %384 = vmatprep.subr.bf16.mxu0 0
      %385 = vmatpush1.bf16.msra.mxu0 0
      %386 = vmatprep.subr.bf16.mxu0 0
      %387 = vmatpush1.bf16.msra.mxu0 0
      %388 = vmatprep.subr.bf16.mxu0 0
      %389 = vmatpush1.bf16.msra.mxu0 0
      %390 = vmatprep.mubr.bf16.mxu0 0
      %391 = vmatmul.mubr.bf16.gmra.mrb[0].mxu0 %v346
      %v392 = vpop.f32.mrb[0].mxu0
      %v393 = vadd.f32 %v317, %v392
      %v394 = vpop.f32.mrb[0].mxu0
      %v395 = vadd.f32 %v317, %v394
      %v396 = vpop.f32.mrb[0].mxu0
      %v397 = vadd.f32 %v322, %v396
      %v398 = vpop.f32.mrb[0].mxu0
      %v399 = vadd.f32 %v322, %v398
      %400 = vmatprep.mubr.bf16.mxu0 0
      %401 = vmatmul.mubr.bf16.gmra.mrb[0].mxu0 %v349
      %v402 = vpop.f32.mrb[0].mxu0
      %v403 = vadd.f32 %v327, %v402
      %v404 = vpop.f32.mrb[0].mxu0
      %v405 = vadd.f32 %v327, %v404
      %v406 = vpop.f32.mrb[0].mxu0
      %v407 = vadd.f32 %v332, %v406
      %v408 = vpop.f32.mrb[0].mxu0
      %v409 = vadd.f32 %v332, %v408
      %410 = vdwg.mxu0
      %v411 = vmax.f32 %v393, 0.0
      %v412 = vmax.f32 %v395, 0.0
      %v413 = vmax.f32 %v397, 0.0
      %v414 = vmax.f32 %v399, 0.0
      %v415 = vmax.f32 %v403, 0.0
      %v416 = vmax.f32 %v405, 0.0
      %v417 = vmax.f32 %v407, 0.0
      %v418 = vmax.f32 %v409, 0.0
      %v419 = vpack.c.bf16 %v413, %v411
      %v420 = vpack.c.bf16 %v414, %v412
      %v421 = vpack.c.bf16 %v417, %v415
      %v422 = vpack.c.bf16 %v418, %v416
      %425 = vrot.lane.b32.xlu0 %v420, 17
      %v426 = vpop.permute.xlu0 %425
      %427 = vrot.lane.b32.xlu0 %v422, 17
      %v428 = vpop.permute.xlu0 %427
      %431 = vrot.lane.b32.xlu0 %v419, 17
      %v432 = vpop.permute.xlu0 %431
      %433 = vrot.lane.b32.xlu0 %v421, 17
      %v434 = vpop.permute.xlu0 %433
      %vm435 = vcmask 138240
      %v436 = vsel %vm435, %v432, %v426
      %v437 = vsel %vm435, %v434, %v428
      %vm440 = vcmask 138240
      %v443 = vsel %vm440, %v426, %v432
      %v447 = vsel %vm440, %v428, %v434
      %v450 = vunpack.c.l.b16 %v292
      %v451 = vunpack.c.h.b16 %v292
      %v452 = vpack.c.b16 %v450, %v450
      %v453 = vpack.c.b16 %v451, %v451
      %v455 = vpack.i.b16 %v452, %v452
      %v457 = vlaneseq
      %v458 = vshrl.u32 %v457, 7
      %v459 = vsub.s32 0, %v458
      %v460 = vrot.slane %v455, %v459
      %v462 = vpack.i.b16 %v453, %v453
      %v464 = vlaneseq
      %v465 = vshrl.u32 %v464, 7
      %v466 = vsub.s32 0, %v465
      %v467 = vrot.slane %v462, %v466
      %v468 = vmul.bf16 %v443, %v460
      %v469 = vmul.bf16 %v436, %v467
      %v470 = vmul.bf16 %v447, %v460
      %v471 = vmul.bf16 %v437, %v467
      %472 = vrot.lane.b32.xlu0 %v420, 16
      %v473 = vpop.permute.xlu0 %472
      %474 = vrot.lane.b32.xlu0 %v422, 16
      %v475 = vpop.permute.xlu0 %474
      %476 = vrot.lane.b32.xlu0 %v419, 16
      %v477 = vpop.permute.xlu0 %476
      %478 = vrot.lane.b32.xlu0 %v421, 16
      %v479 = vpop.permute.xlu0 %478
      %vm480 = vcmask 130048
      %v481 = vsel %vm480, %v477, %v473
      %v482 = vsel %vm480, %v479, %v475
      %vm485 = vcmask 130048
      %v488 = vsel %vm485, %v473, %v477
      %v492 = vsel %vm485, %v475, %v479
      %v494 = vshrl.u32 %v452, 16
      %v495 = vpack.i.b16 %v494, %v494
      %v497 = vlaneseq
      %v498 = vshrl.u32 %v497, 7
      %v499 = vsub.s32 0, %v498
      %v500 = vrot.slane %v495, %v499
      %v501 = vshrl.u32 %v453, 16
      %v502 = vpack.i.b16 %v501, %v501
      %v504 = vlaneseq
      %v505 = vshrl.u32 %v504, 7
      %v506 = vsub.s32 0, %v505
      %v507 = vrot.slane %v502, %v506
      %v508 = vmul.bf16 %v488, %v500
      %v509 = vmul.bf16 %v481, %v507
      %v510 = vmul.bf16 %v492, %v500
      %v511 = vmul.bf16 %v482, %v507
      %512 = vrot.lane.b32.xlu0 %v420, 15
      %v513 = vpop.permute.xlu0 %512
      %514 = vrot.lane.b32.xlu0 %v422, 15
      %v515 = vpop.permute.xlu0 %514
      %516 = vrot.lane.b32.xlu0 %v419, 15
      %v517 = vpop.permute.xlu0 %516
      %518 = vrot.lane.b32.xlu0 %v421, 15
      %v519 = vpop.permute.xlu0 %518
      %vm520 = vcmask 121856
      %v521 = vsel %vm520, %v517, %v513
      %v522 = vsel %vm520, %v519, %v515
      %vm525 = vcmask 121856
      %v528 = vsel %vm525, %v513, %v517
      %v532 = vsel %vm525, %v515, %v519
      %v534 = vlaneseq
      %v535 = vshrl.u32 %v534, 7
      %v536 = vsub.s32 1, %v535
      %v537 = vrot.slane %v455, %v536
      %v538 = vlaneseq
      %v539 = vshrl.u32 %v538, 7
      %v540 = vsub.s32 1, %v539
      %v541 = vrot.slane %v462, %v540
      %v542 = vmul.bf16 %v528, %v537
      %v543 = vmul.bf16 %v521, %v541
      %v544 = vmul.bf16 %v532, %v537
      %v545 = vmul.bf16 %v522, %v541
      %546 = vrot.lane.b32.xlu0 %v420, 1
      %v547 = vpop.permute.xlu0 %546
      %548 = vrot.lane.b32.xlu0 %v422, 1
      %v549 = vpop.permute.xlu0 %548
      %550 = vrot.lane.b32.xlu0 %v419, 1
      %v551 = vpop.permute.xlu0 %550
      %552 = vrot.lane.b32.xlu0 %v421, 1
      %v553 = vpop.permute.xlu0 %552
      %vm554 = vcmask 7168
      %v555 = vsel %vm554, %v551, %v547
      %v556 = vsel %vm554, %v553, %v549
      %vm559 = vcmask 7168
      %v562 = vsel %vm559, %v547, %v551
      %v566 = vsel %vm559, %v549, %v553
      %v568 = vlaneseq
      %v569 = vshrl.u32 %v568, 7
      %v570 = vsub.s32 1, %v569
      %v571 = vrot.slane %v495, %v570
      %v572 = vlaneseq
      %v573 = vshrl.u32 %v572, 7
      %v574 = vsub.s32 1, %v573
      %v575 = vrot.slane %v502, %v574
      %v576 = vmul.bf16 %v562, %v571
      %v577 = vmul.bf16 %v555, %v575
      %v578 = vmul.bf16 %v566, %v571
      %v579 = vmul.bf16 %v556, %v575
      %v580 = vlaneseq
      %v581 = vshrl.u32 %v580, 7
      %v582 = vsub.s32 2, %v581
      %v583 = vrot.slane %v455, %v582
      %v584 = vlaneseq
      %v585 = vshrl.u32 %v584, 7
      %v586 = vsub.s32 2, %v585
      %v587 = vrot.slane %v462, %v586
      %v588 = vmul.bf16 %v419, %v583
      %v589 = vmul.bf16 %v420, %v587
      %v590 = vmul.bf16 %v421, %v583
      %v591 = vmul.bf16 %v422, %v587
      %592 = vrot.lane.b32.xlu0 %v419, 127
      %v593 = vpop.permute.xlu0 %592
      %594 = vrot.lane.b32.xlu0 %v420, 127
      %v595 = vpop.permute.xlu0 %594
      %596 = vrot.lane.b32.xlu0 %v421, 127
      %v597 = vpop.permute.xlu0 %596
      %598 = vrot.lane.b32.xlu0 %v422, 127
      %v599 = vpop.permute.xlu0 %598
      %vm600 = vcmask 1039360
      %v601 = vsel %vm600, %v593, %v595
      %v602 = vsel %vm600, %v597, %v599
      %vm605 = vcmask 1039360
      %v608 = vsel %vm605, %v595, %v593
      %v612 = vsel %vm605, %v599, %v597
      %v614 = vlaneseq
      %v615 = vshrl.u32 %v614, 7
      %v616 = vsub.s32 2, %v615
      %v617 = vrot.slane %v495, %v616
      %v618 = vlaneseq
      %v619 = vshrl.u32 %v618, 7
      %v620 = vsub.s32 2, %v619
      %v621 = vrot.slane %v502, %v620
      %v622 = vmul.bf16 %v601, %v617
      %v623 = vmul.bf16 %v608, %v621
      %v624 = vmul.bf16 %v602, %v617
      %v625 = vmul.bf16 %v612, %v621
      %626 = vrot.lane.b32.xlu0 %v419, 113
      %v627 = vpop.permute.xlu0 %626
      %628 = vrot.lane.b32.xlu0 %v420, 113
      %v629 = vpop.permute.xlu0 %628
      %630 = vrot.lane.b32.xlu0 %v421, 113
      %v631 = vpop.permute.xlu0 %630
      %632 = vrot.lane.b32.xlu0 %v422, 113
      %v633 = vpop.permute.xlu0 %632
      %vm634 = vcmask 924672
      %v635 = vsel %vm634, %v627, %v629
      %v636 = vsel %vm634, %v631, %v633
      %vm639 = vcmask 924672
      %v642 = vsel %vm639, %v629, %v627
      %v646 = vsel %vm639, %v633, %v631
      %v648 = vlaneseq
      %v649 = vshrl.u32 %v648, 7
      %v650 = vsub.s32 3, %v649
      %v651 = vrot.slane %v455, %v650
      %v652 = vlaneseq
      %v653 = vshrl.u32 %v652, 7
      %v654 = vsub.s32 3, %v653
      %v655 = vrot.slane %v462, %v654
      %v656 = vmul.bf16 %v635, %v651
      %v657 = vmul.bf16 %v642, %v655
      %v658 = vmul.bf16 %v636, %v651
      %v659 = vmul.bf16 %v646, %v655
      %660 = vrot.lane.b32.xlu0 %v419, 112
      %v661 = vpop.permute.xlu0 %660
      %662 = vrot.lane.b32.xlu0 %v420, 112
      %v663 = vpop.permute.xlu0 %662
      %664 = vrot.lane.b32.xlu0 %v421, 112
      %v665 = vpop.permute.xlu0 %664
      %666 = vrot.lane.b32.xlu0 %v422, 112
      %v667 = vpop.permute.xlu0 %666
      %vm668 = vcmask 916480
      %v669 = vsel %vm668, %v661, %v663
      %v670 = vsel %vm668, %v665, %v667
      %vm673 = vcmask 916480
      %v676 = vsel %vm673, %v663, %v661
      %v680 = vsel %vm673, %v667, %v665
      %v682 = vlaneseq
      %v683 = vshrl.u32 %v682, 7
      %v684 = vsub.s32 3, %v683
      %v685 = vrot.slane %v495, %v684
      %v686 = vlaneseq
      %v687 = vshrl.u32 %v686, 7
      %v688 = vsub.s32 3, %v687
      %v689 = vrot.slane %v502, %v688
      %v690 = vmul.bf16 %v669, %v685
      %v691 = vmul.bf16 %v676, %v689
      %v692 = vmul.bf16 %v670, %v685
      %v693 = vmul.bf16 %v680, %v689
      %694 = vrot.lane.b32.xlu0 %v419, 111
      %v695 = vpop.permute.xlu0 %694
      %696 = vrot.lane.b32.xlu0 %v420, 111
      %v697 = vpop.permute.xlu0 %696
      %698 = vrot.lane.b32.xlu0 %v421, 111
      %v699 = vpop.permute.xlu0 %698
      %700 = vrot.lane.b32.xlu0 %v422, 111
      %v701 = vpop.permute.xlu0 %700
      %vm702 = vcmask 908288
      %v703 = vsel %vm702, %v695, %v697
      %v704 = vsel %vm702, %v699, %v701
      %vm707 = vcmask 908288
      %v710 = vsel %vm707, %v697, %v695
      %v714 = vsel %vm707, %v701, %v699
      %v717 = vunpack.c.l.b16 %v293
      %v718 = vunpack.c.h.b16 %v293
      %v719 = vpack.c.b16 %v717, %v717
      %v720 = vpack.c.b16 %v718, %v718
      %v722 = vpack.i.b16 %v719, %v719
      %v724 = vlaneseq
      %v725 = vshrl.u32 %v724, 7
      %v726 = vsub.s32 0, %v725
      %v727 = vrot.slane %v722, %v726
      %v729 = vpack.i.b16 %v720, %v720
      %v731 = vlaneseq
      %v732 = vshrl.u32 %v731, 7
      %v733 = vsub.s32 0, %v732
      %v734 = vrot.slane %v729, %v733
      %v735 = vmul.bf16 %v703, %v727
      %v736 = vmul.bf16 %v710, %v734
      %v737 = vmul.bf16 %v704, %v727
      %v738 = vmul.bf16 %v714, %v734
      %v741 = vunpack.c.l.b16 %v290
      %v742 = vunpack.c.h.b16 %v290
      %v743 = vunpack.c.l.b16 %v291
      %v744 = vpack.c.b16 %v741, %v741
      %v745 = vpack.c.b16 %v742, %v742
      %v746 = vpack.c.b16 %v743, %v743
      %vm749 = vcmask 261120
      %v751 = vsel %vm749, %v746, 0
      %753 = vmatprep.subr.bf16.mxu0 %v469
      %754 = vmatpush1.bf16.msra.mxu0 %v468
      %755 = vmatprep.subr.bf16.mxu0 %v471
      %756 = vmatpush1.bf16.msra.mxu0 %v470
      %757 = vmatprep.subr.bf16.mxu0 %v509
      %758 = vmatpush1.bf16.msra.mxu0 %v508
      %759 = vmatprep.subr.bf16.mxu0 %v511
      %760 = vmatpush1.bf16.msra.mxu0 %v510
      %761 = vmatprep.subr.bf16.mxu0 %v543
      %762 = vmatpush1.bf16.msra.mxu0 %v542
      %763 = vmatprep.subr.bf16.mxu0 %v545
      %764 = vmatpush1.bf16.msra.mxu0 %v544
      %765 = vmatprep.subr.bf16.mxu0 %v577
      %766 = vmatpush1.bf16.msra.mxu0 %v576
      %767 = vmatprep.subr.bf16.mxu0 %v579
      %768 = vmatpush1.bf16.msra.mxu0 %v578
      %769 = vmatprep.subr.bf16.mxu0 %v589
      %770 = vmatpush1.bf16.msra.mxu0 %v588
      %771 = vmatprep.subr.bf16.mxu0 %v591
      %772 = vmatpush1.bf16.msra.mxu0 %v590
      %773 = vmatprep.subr.bf16.mxu0 %v623
      %774 = vmatpush1.bf16.msra.mxu0 %v622
      %775 = vmatprep.subr.bf16.mxu0 %v625
      %776 = vmatpush1.bf16.msra.mxu0 %v624
      %777 = vmatprep.subr.bf16.mxu0 %v657
      %778 = vmatpush1.bf16.msra.mxu0 %v656
      %779 = vmatprep.subr.bf16.mxu0 %v659
      %780 = vmatpush1.bf16.msra.mxu0 %v658
      %781 = vmatprep.subr.bf16.mxu0 %v691
      %782 = vmatpush1.bf16.msra.mxu0 %v690
      %783 = vmatprep.subr.bf16.mxu0 %v693
      %784 = vmatpush1.bf16.msra.mxu0 %v692
      %785 = vmatprep.mubr.bf16.mxu0 %v745
      %786 = vmatmul.mubr.bf16.gmra.mrb[0].mxu0 %v744
      %v787 = vpop.f32.mrb[0].mxu0
      %v788 = vadd.f32 0.0, %v787
      %v789 = vpop.f32.mrb[0].mxu0
      %v790 = vadd.f32 0.0, %v789
      %v791 = vpop.f32.mrb[0].mxu0
      %v792 = vpop.f32.mrb[0].mxu0
      %793 = vdwg.mxu0
      %794 = vmatprep.subr.bf16.mxu0 %v736
      %795 = vmatpush1.bf16.msra.mxu0 %v735
      %796 = vmatprep.subr.bf16.mxu0 %v738
      %797 = vmatpush1.bf16.msra.mxu0 %v737
      %798 = vmatprep.subr.bf16.mxu0 0
      %799 = vmatpush1.bf16.msra.mxu0 0
      %800 = vmatprep.subr.bf16.mxu0 0
      %801 = vmatpush1.bf16.msra.mxu0 0
      %802 = vmatprep.subr.bf16.mxu0 0
      %803 = vmatpush1.bf16.msra.mxu0 0
      %804 = vmatprep.subr.bf16.mxu0 0
      %805 = vmatpush1.bf16.msra.mxu0 0
      %806 = vmatprep.subr.bf16.mxu0 0
      %807 = vmatpush1.bf16.msra.mxu0 0
      %808 = vmatprep.subr.bf16.mxu0 0
      %809 = vmatpush1.bf16.msra.mxu0 0
      %810 = vmatprep.subr.bf16.mxu0 0
      %811 = vmatpush1.bf16.msra.mxu0 0
      %812 = vmatprep.subr.bf16.mxu0 0
      %813 = vmatpush1.bf16.msra.mxu0 0
      %814 = vmatprep.subr.bf16.mxu0 0
      %815 = vmatpush1.bf16.msra.mxu0 0
      %816 = vmatprep.subr.bf16.mxu0 0
      %817 = vmatpush1.bf16.msra.mxu0 0
      %818 = vmatprep.subr.bf16.mxu0 0
      %819 = vmatpush1.bf16.msra.mxu0 0
      %820 = vmatprep.subr.bf16.mxu0 0
      %821 = vmatpush1.bf16.msra.mxu0 0
      %822 = vmatprep.subr.bf16.mxu0 0
      %823 = vmatpush1.bf16.msra.mxu0 0
      %824 = vmatprep.subr.bf16.mxu0 0
      %825 = vmatpush1.bf16.msra.mxu0 0
      %826 = vmatprep.mubr.bf16.mxu0 0
      %827 = vmatmul.mubr.bf16.gmra.mrb[0].mxu0 %v751
      %v828 = vpop.f32.mrb[0].mxu0
      %v829 = vadd.f32 %v788, %v828
      %v830 = vpop.f32.mrb[0].mxu0
      %v831 = vadd.f32 %v790, %v830
      %v832 = vpop.f32.mrb[0].mxu0
      %v833 = vpop.f32.mrb[0].mxu0
      %834 = vdwg.mxu0
      %835 = vst [vmem:[%s278] sm:$0xff] %v294
      %836 = vst [vmem:[%s278 + $0x8] sm:$0xff] %v295
      %837 = vst [vmem:[%s278 + $0x10] sm:$0xff] %v829
      %838 = vst [vmem:[%s278 + $0x18] sm:$0xff] %v831
      %p839 = scmp.lt.s32.totalorder %s18, 1
      %s840 = scalar_select %p839, %s18, 1
      %s841 = smul.addr %s840, 4
      %s842 = smul.addr %s841, 8
      %s843 = scalar_lea.vmem %s7, %s842
      // Predicated region
      $region49: #{dense_layer_forward.1} parent=47 // pred_check
        %p844 = pneg %p188
      $region50: #{dense_layer_forward.1} parent=47 // pred_check_branch
        %846 = sbr.rel (%p844) target = $region52
      $region51: #{dense_layer_forward.1} parent=47 // pred_region
        _
      $region52: #{dense_layer_forward.1} parent=47 // pred_fallthru
        _
    $region48: #{dense_layer_forward.1} parent=5 // pred_fallthru
      _
    %p847 = scmp.le.s32.totalorder 2, %s13
    // Predicated region
    $region53: #{dense_layer_forward.1} parent=5 // pred_check
      %p848 = pneg %p847
    $region54: #{dense_layer_forward.1} parent=5 // pred_check_branch
      %850 = sbr.rel (%p848) target = $region56
    $region55: #{dense_layer_forward.1} parent=5 // pred_region
      %s851 = ssub.s32 %s13, 2
      // Predicated region
      $region57: #{dense_layer_forward.1} parent=55 // pred_check
        %p852 = pneg %p194
      $region58: #{dense_layer_forward.1} parent=55 // pred_check_branch
        %854 = sbr.rel (%p852) target = $region60
      $region59: #{dense_layer_forward.1} parent=55 // pred_region
        %p855 = scmp.lt.s32.totalorder %s19, 1
        %s856 = scalar_select %p855, %s19, 1
        %s857 = smul.addr %s856, 4
        %s858 = smul.addr %s857, 8
        %s859 = scalar_lea.vmem %s7, %s858
      $region60: #{dense_layer_forward.1} parent=55 // pred_fallthru
        _
    $region56: #{dense_layer_forward.1} parent=5 // pred_fallthru
      _
  $region6: #{dense_layer_forward.1} parent=0 // loop_footer
    %s17 = sadd.s32 1, %s13
  $region7: #{dense_layer_forward.1} parent=0 // loop_footer_branch
    %12 = sbr.rel target = $region3
  $region8: #{dense_layer_forward.1} parent=0 // loop_exit
    _

</llo_original>
